<compile_context>
chip_gen: v7x
topology: tpu7x:2x2x1
jax: 0.10.0
libtpu: 0.0.40
codegen_flags: <defaults>
</compile_context>

<pallas_src>
import math

import jax
import jax.numpy as jnp
from jax.experimental import pallas as pl
from jax.experimental.pallas import tpu as pltpu

HIDDEN = 128
IN_DIM = 2
HEAD_PAD = 8          # 3 real heads (mu, sigma, value) padded to 8 sublanes
LOG_SQRT_2PI = 0.5 * math.log(2.0 * math.pi)


def _round_up(n, m):
    return ((n + m - 1) // m) * m


def _ac_kernel(x_ref, eps_ref, w1_ref, b1_ref, w2_ref, b2_ref, wh_ref, bh_ref,
               out_ref):
    # x_ref:   [2, TB] f32   (batch along lanes)
    # eps_ref: [1, TB] f32
    # w1_ref:  [128, 2] f32,  b1_ref: [128, 1] f32
    # w2_ref:  [128, 128] bf16, b2_ref: [128, 1] f32
    # wh_ref:  [8, 128] bf16 (rows 0..2 = mu/sigma/value heads), bh_ref: [8, 1] f32
    # out_ref: [4, TB] f32  rows = (log_prob, action, entropy, value)

    x0 = x_ref[0:1, :]                                   # [1, TB]
    x1 = x_ref[1:2, :]                                   # [1, TB]

    # --- layer 1 on the VPU: K=2 as two rank-1 updates (avoids a padded
    #     K=2 -> K=128 MXU pass) ---
    h1 = w1_ref[:, 0:1] * x0 + w1_ref[:, 1:2] * x1 + b1_ref[...]   # [128, TB]
    h1 = jnp.maximum(h1, 0.0)

    # --- layer 2 on the MXU: bf16 operands, f32 accumulation ---
    h2 = jnp.dot(w2_ref[...], h1.astype(jnp.bfloat16),
                 preferred_element_type=jnp.float32) + b2_ref[...]  # [128, TB]
    h2 = jnp.maximum(h2, 0.0)

    # --- three heads fused into a single [8,128] x [128,TB] matmul ---
    heads = jnp.dot(wh_ref[...], h2.astype(jnp.bfloat16),
                    preferred_element_type=jnp.float32) + bh_ref[...]  # [8, TB]

    mu_pre = heads[0:1, :]                               # [1, TB]  (lane-dense)
    sig_pre = heads[1:2, :]
    value = heads[2:3, :]

    mu = 2.0 * jnp.tanh(mu_pre)
    # numerically stable softplus: log(1+exp(x)) = max(x,0) + log1p(exp(-|x|))
    sigma = jnp.maximum(sig_pre, 0.0) + jnp.log1p(jnp.exp(-jnp.abs(sig_pre))) + 1e-6

    eps = eps_ref[...]                                   # [1, TB]
    action = jnp.clip(mu + sigma * eps, -2.0, 2.0)

    # approx=False keeps the 1e-4-level agreement with the reference
    inv_sigma = pl.reciprocal(sigma, approx=False)
    z = (action - mu) * inv_sigma
    log_sigma = jnp.log(sigma)
    log_prob = -0.5 * z * z - log_sigma - LOG_SQRT_2PI
    entropy = 0.5 + LOG_SQRT_2PI + log_sigma

    # single fused, lane-dense output store
    out_ref[...] = jnp.concatenate([log_prob, action, entropy, value], axis=0)


def ac_forward(x, eps, params, *, tb=512):
    """x: [B, 2] f32, eps: [B, 1] f32 standard normal.  Returns 4 arrays [B, 1]."""
    # TODO(synk): eps could be generated in-kernel via pltpu.prng_seed /
    # stateful_normal; kept as an input for deterministic parity with the reference.
    B = x.shape[0]
    tb = _round_up(max(128, min(tb, _round_up(B, 128))), 128)
    b_pad = _round_up(B, tb)
    pad = b_pad - B

    xt = jnp.pad(x.astype(jnp.float32).T, ((0, 0), (0, pad)))          # [2, Bp]
    epst = jnp.pad(eps.astype(jnp.float32).reshape(1, B), ((0, 0), (0, pad)))

    grid = (b_pad // tb,)

    weight_bytes = sum(int(v.size) * v.dtype.itemsize
                       for v in (params["w1"], params["b1"], params["w2"],
                                 params["b2"], params["wh"], params["bh"]))
    cost = pl.CostEstimate(
        flops=2 * b_pad * HIDDEN * (IN_DIM + HIDDEN + HEAD_PAD),
        transcendentals=5 * b_pad,
        bytes_accessed=4 * (int(xt.size) + int(epst.size) + 4 * b_pad) + weight_bytes,
    )

    fn = pl.pallas_call(
        _ac_kernel,
        out_shape=jax.ShapeDtypeStruct((4, b_pad), jnp.float32),
        grid_spec=pltpu.PrefetchScalarGridSpec(
            num_scalar_prefetch=0,
            grid=grid,
            in_specs=[
                pl.BlockSpec((2, tb), lambda i: (0, i)),            # x^T tile
                pl.BlockSpec((1, tb), lambda i: (0, i)),            # eps^T tile
                pl.BlockSpec((HIDDEN, IN_DIM), lambda i: (0, 0)),   # w1 (resident)
                pl.BlockSpec((HIDDEN, 1), lambda i: (0, 0)),        # b1
                pl.BlockSpec((HIDDEN, HIDDEN), lambda i: (0, 0)),   # w2
                pl.BlockSpec((HIDDEN, 1), lambda i: (0, 0)),        # b2
                pl.BlockSpec((HEAD_PAD, HIDDEN), lambda i: (0, 0)), # fused heads W
                pl.BlockSpec((HEAD_PAD, 1), lambda i: (0, 0)),      # fused heads b
            ],
            out_specs=pl.BlockSpec((4, tb), lambda i: (0, i)),
        ),
        compiler_params=pltpu.CompilerParams(
            dimension_semantics=("parallel",)),
        cost_estimate=cost,
    )
    packed = fn(xt, epst, params["w1"], params["b1"], params["w2"],
                params["b2"], params["wh"], params["bh"])               # [4, Bp]

    packed = packed[:, :B]
    log_prob = packed[0:1, :].T
    action = packed[1:2, :].T
    entropy = packed[2:3, :].T
    value = packed[3:4, :].T
    return log_prob, action, entropy, value


def init_params(key):
    """Synthetic init mirroring the module's shapes (PyTorch [out, in] layout).

    Base layers: kaiming_uniform (relu gain), bias = 0.01 (init_weights).
    Heads: PyTorch default Linear init, i.e. U(+-1/sqrt(fan_in)).
    w2 / head weights are stored bf16 (MXU operands); everything else f32.
    """
    k1, k2, kmw, kmb, ksw, ksb, kvw, kvb = jax.random.split(key, 8)

    def kaiming_relu(k, out_f, in_f):
        bound = math.sqrt(6.0 / in_f)
        return jax.random.uniform(k, (out_f, in_f), jnp.float32, -bound, bound)

    def default_linear(kw, kb, out_f, in_f):
        bound = 1.0 / math.sqrt(in_f)
        w = jax.random.uniform(kw, (out_f, in_f), jnp.float32, -bound, bound)
        b = jax.random.uniform(kb, (out_f, 1), jnp.float32, -bound, bound)
        return w, b

    w1 = kaiming_relu(k1, HIDDEN, IN_DIM)
    b1 = jnp.full((HIDDEN, 1), 0.01, jnp.float32)
    w2 = kaiming_relu(k2, HIDDEN, HIDDEN)
    b2 = jnp.full((HIDDEN, 1), 0.01, jnp.float32)

    w_mu, b_mu = default_linear(kmw, kmb, 1, HIDDEN)
    w_sig, b_sig = default_linear(ksw, ksb, 1, HIDDEN)
    w_val, b_val = default_linear(kvw, kvb, 1, HIDDEN)

    wh = jnp.zeros((HEAD_PAD, HIDDEN), jnp.float32)
    wh = wh.at[0].set(w_mu[0]).at[1].set(w_sig[0]).at[2].set(w_val[0])
    bh = jnp.zeros((HEAD_PAD, 1), jnp.float32)
    bh = bh.at[0].set(b_mu[0]).at[1].set(b_sig[0]).at[2].set(b_val[0])

    return {"w1": w1, "b1": b1,
            "w2": w2.astype(jnp.bfloat16), "b2": b2,
            "wh": wh.astype(jnp.bfloat16), "bh": bh}


def _reference(x, eps, params):
    """Pure-JAX reference of the same forward pass (same bf16 matmul operands)."""
    w1 = params["w1"]                                          # [128, 2]
    h1 = jnp.maximum(x[:, 0:1] * w1[:, 0].reshape(1, HIDDEN)
                     + x[:, 1:2] * w1[:, 1].reshape(1, HIDDEN)
                     + params["b1"].reshape(1, HIDDEN), 0.0)
    h2 = jnp.maximum(
        jnp.dot(h1.astype(jnp.bfloat16), params["w2"].T,
                preferred_element_type=jnp.float32)
        + params["b2"].reshape(1, HIDDEN), 0.0)
    heads = (jnp.dot(h2.astype(jnp.bfloat16), params["wh"].T,
                     preferred_element_type=jnp.float32)
             + params["bh"].reshape(1, HEAD_PAD))
    mu = 2.0 * jnp.tanh(heads[:, 0:1])
    sigma = jax.nn.softplus(heads[:, 1:2]) + 1e-6
    value = heads[:, 2:3]
    action = jnp.clip(mu + sigma * eps, -2.0, 2.0)
    log_prob = -((action - mu) ** 2) / (2.0 * sigma ** 2) - jnp.log(sigma) - LOG_SQRT_2PI
    entropy = 0.5 + LOG_SQRT_2PI + jnp.log(sigma)
    return log_prob, action, entropy, value


if __name__ == "__main__":
    key = jax.random.PRNGKey(0)
    k_params, k_x, k_eps = jax.random.split(key, 3)
    params = init_params(k_params)

    # (B=8, grid of 1 128-wide tile) and (B=300, 3 tiles of 128 -> exercises
    # the batch grid + padding path).
    for B, tb in ((8, 512), (300, 128)):
        x = jax.random.normal(jax.random.fold_in(k_x, B), (B, IN_DIM), jnp.float32)
        eps = jax.random.normal(jax.random.fold_in(k_eps, B), (B, 1), jnp.float32)

        outs = ac_forward(x, eps, params, tb=tb)
        outs = jax.block_until_ready(outs)

        refs = _reference(x, eps, params)
        for o, r in zip(outs, refs):
            assert o.shape == (B, 1) and o.dtype == jnp.float32
            assert jnp.allclose(o, r, atol=5e-4, rtol=5e-4), \
                float(jnp.max(jnp.abs(o - r)))

    print("KERNEL_OK")
</pallas_src>

<mosaic_0001>
module attributes {stable_mosaic.version = 11 : i64} {
  func.func @_ac_kernel(%arg0: i32, %arg1: memref<2x128xf32, #tpu.memory_space<vmem>>, %arg2: memref<1x128xf32, #tpu.memory_space<vmem>>, %arg3: memref<128x2xf32, #tpu.memory_space<vmem>>, %arg4: memref<128x1xf32, #tpu.memory_space<vmem>>, %arg5: memref<128x128xbf16, #tpu.memory_space<vmem>>, %arg6: memref<128x1xf32, #tpu.memory_space<vmem>>, %arg7: memref<8x128xbf16, #tpu.memory_space<vmem>>, %arg8: memref<8x1xf32, #tpu.memory_space<vmem>>, %arg9: memref<4x128xf32, #tpu.memory_space<vmem>>) attributes {dimension_semantics = [#tpu.dimension_semantics<parallel>], iteration_bounds = array<i64: 1>, scalar_prefetch = 0 : i64, scratch_operands = 0 : i64, tpu.core_type = #tpu.core_type<tc>, window_params = [{transform_indices = @transform_0, window_bounds = array<i64: 2, 128>}, {transform_indices = @transform_1, window_bounds = array<i64: 1, 128>}, {pipeline_mode = #tpu.pipeline_mode<synchronous>, transform_indices = @transform_2, window_bounds = array<i64: 128, 2>}, {pipeline_mode = #tpu.pipeline_mode<synchronous>, transform_indices = @transform_3, window_bounds = array<i64: 128, 1>}, {pipeline_mode = #tpu.pipeline_mode<synchronous>, transform_indices = @transform_4, window_bounds = array<i64: 128, 128>}, {pipeline_mode = #tpu.pipeline_mode<synchronous>, transform_indices = @transform_5, window_bounds = array<i64: 128, 1>}, {pipeline_mode = #tpu.pipeline_mode<synchronous>, transform_indices = @transform_6, window_bounds = array<i64: 8, 128>}, {pipeline_mode = #tpu.pipeline_mode<synchronous>, transform_indices = @transform_7, window_bounds = array<i64: 8, 1>}, {transform_indices = @transform_8, window_bounds = array<i64: 4, 128>}]} {
    %c0 = arith.constant 0 : index
    %c0_0 = arith.constant 0 : index
    %0 = vector.load %arg1[%c0, %c0_0] : memref<2x128xf32, #tpu.memory_space<vmem>>, vector<1x128xf32>
    %c1 = arith.constant 1 : index
    %c0_1 = arith.constant 0 : index
    %1 = vector.load %arg1[%c1, %c0_1] : memref<2x128xf32, #tpu.memory_space<vmem>>, vector<1x128xf32>
    %c0_2 = arith.constant 0 : index
    %c0_3 = arith.constant 0 : index
    %2 = vector.load %arg3[%c0_2, %c0_3] : memref<128x2xf32, #tpu.memory_space<vmem>>, vector<128x1xf32>
    %3 = vector.broadcast %2 : vector<128x1xf32> to vector<128x128xf32>
    %4 = vector.broadcast %0 : vector<1x128xf32> to vector<128x128xf32>
    %5 = arith.mulf %3, %4 : vector<128x128xf32>
    %c0_4 = arith.constant 0 : index
    %c1_5 = arith.constant 1 : index
    %6 = vector.load %arg3[%c0_4, %c1_5] : memref<128x2xf32, #tpu.memory_space<vmem>>, vector<128x1xf32>
    %7 = vector.broadcast %6 : vector<128x1xf32> to vector<128x128xf32>
    %8 = vector.broadcast %1 : vector<1x128xf32> to vector<128x128xf32>
    %9 = arith.mulf %7, %8 : vector<128x128xf32>
    %10 = arith.addf %5, %9 : vector<128x128xf32>
    %c0_6 = arith.constant 0 : index
    %c0_7 = arith.constant 0 : index
    %11 = vector.load %arg4[%c0_6, %c0_7] : memref<128x1xf32, #tpu.memory_space<vmem>>, vector<128x1xf32>
    %12 = vector.broadcast %11 : vector<128x1xf32> to vector<128x128xf32>
    %13 = arith.addf %10, %12 : vector<128x128xf32>
    %cst = arith.constant 0.000000e+00 : f32
    %14 = vector.broadcast %cst : f32 to vector<128x128xf32>
    %15 = arith.maximumf %13, %14 : vector<128x128xf32>
    %c0_8 = arith.constant 0 : index
    %c0_9 = arith.constant 0 : index
    %16 = vector.load %arg5[%c0_8, %c0_9] : memref<128x128xbf16, #tpu.memory_space<vmem>>, vector<128x128xbf16>
    %17 = arith.truncf %15 : vector<128x128xf32> to vector<128x128xbf16>
    %cst_10 = arith.constant dense<0.000000e+00> : vector<128x128xf32>
    %18 = tpu.matmul %16, %17, %cst_10 {dimension_numbers = #tpu.dot_dimension_numbers<[1], [0], [0], [1], [0, 0, 1, 1], [], []>} : vector<128x128xbf16>, vector<128x128xbf16>, vector<128x128xf32> -> vector<128x128xf32>
    %c0_11 = arith.constant 0 : index
    %c0_12 = arith.constant 0 : index
    %19 = vector.load %arg6[%c0_11, %c0_12] : memref<128x1xf32, #tpu.memory_space<vmem>>, vector<128x1xf32>
    %20 = vector.broadcast %19 : vector<128x1xf32> to vector<128x128xf32>
    %21 = arith.addf %18, %20 : vector<128x128xf32>
    %cst_13 = arith.constant 0.000000e+00 : f32
    %22 = vector.broadcast %cst_13 : f32 to vector<128x128xf32>
    %23 = arith.maximumf %21, %22 : vector<128x128xf32>
    %c0_14 = arith.constant 0 : index
    %c0_15 = arith.constant 0 : index
    %24 = vector.load %arg7[%c0_14, %c0_15] : memref<8x128xbf16, #tpu.memory_space<vmem>>, vector<8x128xbf16>
    %25 = arith.truncf %23 : vector<128x128xf32> to vector<128x128xbf16>
    %cst_16 = arith.constant dense<0.000000e+00> : vector<8x128xf32>
    %26 = tpu.matmul %24, %25, %cst_16 {dimension_numbers = #tpu.dot_dimension_numbers<[1], [0], [0], [1], [0, 0, 1, 1], [], []>} : vector<8x128xbf16>, vector<128x128xbf16>, vector<8x128xf32> -> vector<8x128xf32>
    %c0_17 = arith.constant 0 : index
    %c0_18 = arith.constant 0 : index
    %27 = vector.load %arg8[%c0_17, %c0_18] : memref<8x1xf32, #tpu.memory_space<vmem>>, vector<8x1xf32>
    %28 = vector.broadcast %27 : vector<8x1xf32> to vector<8x128xf32>
    %29 = arith.addf %26, %28 : vector<8x128xf32>
    %30 = vector.extract_strided_slice %29 {offsets = [0, 0], sizes = [1, 128], strides = [1, 1]} : vector<8x128xf32> to vector<1x128xf32>
    %31 = vector.extract_strided_slice %29 {offsets = [1, 0], sizes = [1, 128], strides = [1, 1]} : vector<8x128xf32> to vector<1x128xf32>
    %32 = vector.extract_strided_slice %29 {offsets = [2, 0], sizes = [1, 128], strides = [1, 1]} : vector<8x128xf32> to vector<1x128xf32>
    %33 = math.tanh %30 : vector<1x128xf32>
    %cst_19 = arith.constant 2.000000e+00 : f32
    %34 = vector.broadcast %cst_19 : f32 to vector<1x128xf32>
    %35 = arith.mulf %34, %33 : vector<1x128xf32>
    %cst_20 = arith.constant 0.000000e+00 : f32
    %36 = vector.broadcast %cst_20 : f32 to vector<1x128xf32>
    %37 = arith.maximumf %31, %36 : vector<1x128xf32>
    %38 = math.absf %31 : vector<1x128xf32>
    %cst_21 = arith.constant 0.000000e+00 : f32
    %39 = vector.broadcast %cst_21 : f32 to vector<1x128xf32>
    %40 = arith.subf %39, %38 : vector<1x128xf32>
    %41 = math.exp %40 : vector<1x128xf32>
    %42 = math.log1p %41 : vector<1x128xf32>
    %43 = arith.addf %37, %42 : vector<1x128xf32>
    %cst_22 = arith.constant 9.99999997E-7 : f32
    %44 = vector.broadcast %cst_22 : f32 to vector<1x128xf32>
    %45 = arith.addf %43, %44 : vector<1x128xf32>
    %c0_23 = arith.constant 0 : index
    %c0_24 = arith.constant 0 : index
    %46 = vector.load %arg2[%c0_23, %c0_24] : memref<1x128xf32, #tpu.memory_space<vmem>>, vector<1x128xf32>
    %47 = arith.mulf %45, %46 : vector<1x128xf32>
    %48 = arith.addf %35, %47 : vector<1x128xf32>
    %cst_25 = arith.constant -2.000000e+00 : f32
    %cst_26 = arith.constant 2.000000e+00 : f32
    %49 = vector.broadcast %cst_25 : f32 to vector<1x128xf32>
    %50 = arith.maximumf %49, %48 : vector<1x128xf32>
    %51 = vector.broadcast %cst_26 : f32 to vector<1x128xf32>
    %52 = arith.minimumf %51, %50 : vector<1x128xf32>
    %53 = tpu.reciprocal %45 : vector<1x128xf32> -> vector<1x128xf32>
    %54 = arith.subf %52, %35 : vector<1x128xf32>
    %55 = arith.mulf %54, %53 : vector<1x128xf32>
    %56 = math.log %45 : vector<1x128xf32>
    %cst_27 = arith.constant -5.000000e-01 : f32
    %57 = vector.broadcast %cst_27 : f32 to vector<1x128xf32>
    %58 = arith.mulf %57, %55 : vector<1x128xf32>
    %59 = arith.mulf %58, %55 : vector<1x128xf32>
    %60 = arith.subf %59, %56 : vector<1x128xf32>
    %cst_28 = arith.constant 0.918938517 : f32
    %61 = vector.broadcast %cst_28 : f32 to vector<1x128xf32>
    %62 = arith.subf %60, %61 : vector<1x128xf32>
    %cst_29 = arith.constant 1.41893852 : f32
    %63 = vector.broadcast %cst_29 : f32 to vector<1x128xf32>
    %64 = arith.addf %63, %56 : vector<1x128xf32>
    %65 = tpu.concatenate %62, %52, %64, %32 in 0 : vector<1x128xf32>, vector<1x128xf32>, vector<1x128xf32>, vector<1x128xf32> -> vector<4x128xf32>
    %c0_30 = arith.constant 0 : index
    %c0_31 = arith.constant 0 : index
    %66 = vector.load %arg9[%c0_30, %c0_31] : memref<4x128xf32, #tpu.memory_space<vmem>>, vector<4x128xf32>
    tpu.vector_store %arg9[%c0_30, %c0_31], %65 {strides = array<i32>} : memref<4x128xf32, #tpu.memory_space<vmem>>, vector<4x128xf32>,
    return
  }
  func.func @transform_0(%arg0: i32) -> (i32, i32) {
    %c0_i32 = arith.constant 0 : i32
    %c0_i32_0 = arith.constant 0 : i32
    return %c0_i32, %arg0 : i32, i32
  }
  func.func @transform_1(%arg0: i32) -> (i32, i32) {
    %c0_i32 = arith.constant 0 : i32
    %c0_i32_0 = arith.constant 0 : i32
    return %c0_i32, %arg0 : i32, i32
  }
  func.func @transform_2(%arg0: i32) -> (i32, i32) {
    %c0_i32 = arith.constant 0 : i32
    %c0_i32_0 = arith.constant 0 : i32
    %c0_i32_1 = arith.constant 0 : i32
    return %c0_i32, %c0_i32_0 : i32, i32
  }
  func.func @transform_3(%arg0: i32) -> (i32, i32) {
    %c0_i32 = arith.constant 0 : i32
    %c0_i32_0 = arith.constant 0 : i32
    %c0_i32_1 = arith.constant 0 : i32
    return %c0_i32, %c0_i32_0 : i32, i32
  }
  func.func @transform_4(%arg0: i32) -> (i32, i32) {
    %c0_i32 = arith.constant 0 : i32
    %c0_i32_0 = arith.constant 0 : i32
    %c0_i32_1 = arith.constant 0 : i32
    return %c0_i32, %c0_i32_0 : i32, i32
  }
  func.func @transform_5(%arg0: i32) -> (i32, i32) {
    %c0_i32 = arith.constant 0 : i32
    %c0_i32_0 = arith.constant 0 : i32
    %c0_i32_1 = arith.constant 0 : i32
    return %c0_i32, %c0_i32_0 : i32, i32
  }
  func.func @transform_6(%arg0: i32) -> (i32, i32) {
    %c0_i32 = arith.constant 0 : i32
    %c0_i32_0 = arith.constant 0 : i32
    %c0_i32_1 = arith.constant 0 : i32
    return %c0_i32, %c0_i32_0 : i32, i32
  }
  func.func @transform_7(%arg0: i32) -> (i32, i32) {
    %c0_i32 = arith.constant 0 : i32
    %c0_i32_0 = arith.constant 0 : i32
    %c0_i32_1 = arith.constant 0 : i32
    return %c0_i32, %c0_i32_0 : i32, i32
  }
  func.func @transform_8(%arg0: i32) -> (i32, i32) {
    %c0_i32 = arith.constant 0 : i32
    %c0_i32_0 = arith.constant 0 : i32
    return %c0_i32, %arg0 : i32, i32
  }
}

</mosaic_0001>

<llo_original>
// kernel: tpu_custom_call.1
$region0: #{tpu_custom_call.1}
  #allocation0 [shape = 'u32[]', space=smem, size = 0x4, offset = 0x4, fixed_abs, tag = 'smem constant byte address 0x4 - core index']
  #allocation1 [shape = 'u32[144,128]{1,0:T(1,128)}', space=vmem, size = 0x12000, scoped, tag = 'internal scratch']
  %s0 = inlined_call_operand.vmem [shape: f32[2,128], index: 0, kind: input, shape index: {}]
  %s1 = inlined_call_operand.vmem [shape: f32[1,128], index: 1, kind: input, shape index: {}]
  %s2 = inlined_call_operand.vmem [shape: f32[128,2], index: 2, kind: input, shape index: {}]
  %s3 = inlined_call_operand.vmem [shape: f32[128,1], index: 3, kind: input, shape index: {}]
  %s4 = inlined_call_operand.vmem [shape: bf16[128,128], index: 4, kind: input, shape index: {}]
  %s5 = inlined_call_operand.vmem [shape: f32[128,1], index: 5, kind: input, shape index: {}]
  %s6 = inlined_call_operand.vmem [shape: bf16[8,128], index: 6, kind: input, shape index: {}]
  %s7 = inlined_call_operand.vmem [shape: f32[8,1], index: 7, kind: input, shape index: {}]
  %s8 = inlined_call_operand.hbm [shape: f32[4,128], index: 8, kind: output, shape index: {}]
  %s9 = sld [smem:[#allocation0]]
  $region42: #{tpu_custom_call.1} parent=0
    _
  %s11 = ssub.s32 1, %s9
  %s12 = scalar_select 0, %s11, %s9
  $region1: #{tpu_custom_call.1} parent=0
    #allocation2 [shape = 'u8[2048]{0}', space=vmem, size = 0x800, scoped, tag = 'output window, operand 0, single buffered']
    #allocation3 [shape = 's32[1]{0}', space=sflag, size = 0x4, scoped, tag = 'scoped memory for tpu_custom_call.1']
    %13 = vsyncpa [#allocation3], 0
    // Predicated region
    $region2: #{tpu_custom_call.1} parent=1 // pred_check
      _
    $region3: #{tpu_custom_call.1} parent=1 // pred_check_branch
      %15 = sbr.rel (0) target = $region5
    $region4: #{tpu_custom_call.1} parent=1 // pred_region
      _
    $region5: #{tpu_custom_call.1} parent=1 // pred_fallthru
      _
    // Predicated region
    $region6: #{tpu_custom_call.1} parent=1 // pred_check
      _
    $region7: #{tpu_custom_call.1} parent=1 // pred_check_branch
      %17 = sbr.rel (0) target = $region9
    $region8: #{tpu_custom_call.1} parent=1 // pred_region
      _
    $region9: #{tpu_custom_call.1} parent=1 // pred_fallthru
      _
    // Predicated region
    $region10: #{tpu_custom_call.1} parent=1 // pred_check
      _
    $region11: #{tpu_custom_call.1} parent=1 // pred_check_branch
      %19 = sbr.rel (0) target = $region13
    $region12: #{tpu_custom_call.1} parent=1 // pred_region
      _
    $region13: #{tpu_custom_call.1} parent=1 // pred_fallthru
      _
    // Predicated region
    $region14: #{tpu_custom_call.1} parent=1 // pred_check
      _
    $region15: #{tpu_custom_call.1} parent=1 // pred_check_branch
      %21 = sbr.rel (0) target = $region17
    $region16: #{tpu_custom_call.1} parent=1 // pred_region
      _
    $region17: #{tpu_custom_call.1} parent=1 // pred_fallthru
      _
    // Predicated region
    $region18: #{tpu_custom_call.1} parent=1 // pred_check
      _
    $region19: #{tpu_custom_call.1} parent=1 // pred_check_branch
      %23 = sbr.rel (0) target = $region21
    $region20: #{tpu_custom_call.1} parent=1 // pred_region
      _
    $region21: #{tpu_custom_call.1} parent=1 // pred_fallthru
      _
    // Predicated region
    $region22: #{tpu_custom_call.1} parent=1 // pred_check
      _
    $region23: #{tpu_custom_call.1} parent=1 // pred_check_branch
      %25 = sbr.rel (0) target = $region25
    $region24: #{tpu_custom_call.1} parent=1 // pred_region
      _
    $region25: #{tpu_custom_call.1} parent=1 // pred_fallthru
      _
    // Predicated region
    $region26: #{tpu_custom_call.1} parent=1 // pred_check
      _
    $region27: #{tpu_custom_call.1} parent=1 // pred_check_branch
      %27 = sbr.rel (0) target = $region29
    $region28: #{tpu_custom_call.1} parent=1 // pred_region
      _
    $region29: #{tpu_custom_call.1} parent=1 // pred_fallthru
      _
    // Predicated region
    $region30: #{tpu_custom_call.1} parent=1 // pred_check
      _
    $region31: #{tpu_custom_call.1} parent=1 // pred_check_branch
      %29 = sbr.rel (0) target = $region33
    $region32: #{tpu_custom_call.1} parent=1 // pred_region
      _
    $region33: #{tpu_custom_call.1} parent=1 // pred_fallthru
      _
    %v31 = vld [vmem:[%s0] sm:$0x1]
    %v32 = vld [vmem:[%s0 + $0x1] sm:$0x1]
    %v33 = vld [vmem:[%s2] sm:$0xff]
    %v34 = vld [vmem:[%s2 + $0x8] sm:$0xff]
    %v35 = vld [vmem:[%s2 + $0x10] sm:$0xff]
    %v36 = vld [vmem:[%s2 + $0x18] sm:$0xff]
    %v37 = vld [vmem:[%s2 + $0x20] sm:$0xff]
    %v38 = vld [vmem:[%s2 + $0x28] sm:$0xff]
    %v39 = vld [vmem:[%s2 + $0x30] sm:$0xff]
    %v40 = vld [vmem:[%s2 + $0x38] sm:$0xff]
    %v41 = vld [vmem:[%s2 + $0x40] sm:$0xff]
    %v42 = vld [vmem:[%s2 + $0x48] sm:$0xff]
    %v43 = vld [vmem:[%s2 + $0x50] sm:$0xff]
    %v44 = vld [vmem:[%s2 + $0x58] sm:$0xff]
    %v45 = vld [vmem:[%s2 + $0x60] sm:$0xff]
    %v46 = vld [vmem:[%s2 + $0x68] sm:$0xff]
    %v47 = vld [vmem:[%s2 + $0x70] sm:$0xff]
    %v48 = vld [vmem:[%s2 + $0x78] sm:$0xff]
    %50 = vset.pattern.permute.xlu0 0
    %51 = vperm.xlu0 %50, %v33
    %v52 = vpop.permute.xlu0 %51
    %55 = vset.pattern.permute.xlu0 0
    %56 = vperm.xlu0 %55, %v34
    %v57 = vpop.permute.xlu0 %56
    %60 = vset.pattern.permute.xlu0 0
    %61 = vperm.xlu0 %60, %v35
    %v62 = vpop.permute.xlu0 %61
    %65 = vset.pattern.permute.xlu0 0
    %66 = vperm.xlu0 %65, %v36
    %v67 = vpop.permute.xlu0 %66
    %70 = vset.pattern.permute.xlu0 0
    %71 = vperm.xlu0 %70, %v37
    %v72 = vpop.permute.xlu0 %71
    %75 = vset.pattern.permute.xlu0 0
    %76 = vperm.xlu0 %75, %v38
    %v77 = vpop.permute.xlu0 %76
    %80 = vset.pattern.permute.xlu0 0
    %81 = vperm.xlu0 %80, %v39
    %v82 = vpop.permute.xlu0 %81
    %85 = vset.pattern.permute.xlu0 0
    %86 = vperm.xlu0 %85, %v40
    %v87 = vpop.permute.xlu0 %86
    %90 = vset.pattern.permute.xlu0 0
    %91 = vperm.xlu0 %90, %v41
    %v92 = vpop.permute.xlu0 %91
    %95 = vset.pattern.permute.xlu0 0
    %96 = vperm.xlu0 %95, %v42
    %v97 = vpop.permute.xlu0 %96
    %100 = vset.pattern.permute.xlu0 0
    %101 = vperm.xlu0 %100, %v43
    %v102 = vpop.permute.xlu0 %101
    %105 = vset.pattern.permute.xlu0 0
    %106 = vperm.xlu0 %105, %v44
    %v107 = vpop.permute.xlu0 %106
    %110 = vset.pattern.permute.xlu0 0
    %111 = vperm.xlu0 %110, %v45
    %v112 = vpop.permute.xlu0 %111
    %115 = vset.pattern.permute.xlu0 0
    %116 = vperm.xlu0 %115, %v46
    %v117 = vpop.permute.xlu0 %116
    %120 = vset.pattern.permute.xlu0 0
    %121 = vperm.xlu0 %120, %v47
    %v122 = vpop.permute.xlu0 %121
    %125 = vset.pattern.permute.xlu0 0
    %126 = vperm.xlu0 %125, %v48
    %v127 = vpop.permute.xlu0 %126
    %v129 = vlaneseq
    %v130 = vshrl.u32 %v129, 7
    %v131 = vsub.s32 0, %v130
    %v132 = vrot.slane %v31, %v131
    %v133 = vmul.f32 %v52, %v132
    %v134 = vmul.f32 %v57, %v132
    %v135 = vmul.f32 %v62, %v132
    %v136 = vmul.f32 %v67, %v132
    %v137 = vmul.f32 %v72, %v132
    %v138 = vmul.f32 %v77, %v132
    %v139 = vmul.f32 %v82, %v132
    %v140 = vmul.f32 %v87, %v132
    %v141 = vmul.f32 %v92, %v132
    %v142 = vmul.f32 %v97, %v132
    %v143 = vmul.f32 %v102, %v132
    %v144 = vmul.f32 %v107, %v132
    %v145 = vmul.f32 %v112, %v132
    %v146 = vmul.f32 %v117, %v132
    %v147 = vmul.f32 %v122, %v132
    %v148 = vmul.f32 %v127, %v132
    %149 = vset.pattern.permute.xlu0 1
    %150 = vperm.xlu0 %149, %v33
    %v151 = vpop.permute.xlu0 %150
    %153 = vset.pattern.permute.xlu0 1
    %154 = vperm.xlu0 %153, %v34
    %v155 = vpop.permute.xlu0 %154
    %157 = vset.pattern.permute.xlu0 1
    %158 = vperm.xlu0 %157, %v35
    %v159 = vpop.permute.xlu0 %158
    %161 = vset.pattern.permute.xlu0 1
    %162 = vperm.xlu0 %161, %v36
    %v163 = vpop.permute.xlu0 %162
    %165 = vset.pattern.permute.xlu0 1
    %166 = vperm.xlu0 %165, %v37
    %v167 = vpop.permute.xlu0 %166
    %169 = vset.pattern.permute.xlu0 1
    %170 = vperm.xlu0 %169, %v38
    %v171 = vpop.permute.xlu0 %170
    %173 = vset.pattern.permute.xlu0 1
    %174 = vperm.xlu0 %173, %v39
    %v175 = vpop.permute.xlu0 %174
    %177 = vset.pattern.permute.xlu0 1
    %178 = vperm.xlu0 %177, %v40
    %v179 = vpop.permute.xlu0 %178
    %181 = vset.pattern.permute.xlu0 1
    %182 = vperm.xlu0 %181, %v41
    %v183 = vpop.permute.xlu0 %182
    %185 = vset.pattern.permute.xlu0 1
    %186 = vperm.xlu0 %185, %v42
    %v187 = vpop.permute.xlu0 %186
    %189 = vset.pattern.permute.xlu0 1
    %190 = vperm.xlu0 %189, %v43
    %v191 = vpop.permute.xlu0 %190
    %193 = vset.pattern.permute.xlu0 1
    %194 = vperm.xlu0 %193, %v44
    %v195 = vpop.permute.xlu0 %194
    %197 = vset.pattern.permute.xlu0 1
    %198 = vperm.xlu0 %197, %v45
    %v199 = vpop.permute.xlu0 %198
    %201 = vset.pattern.permute.xlu0 1
    %202 = vperm.xlu0 %201, %v46
    %v203 = vpop.permute.xlu0 %202
    %205 = vset.pattern.permute.xlu0 1
    %206 = vperm.xlu0 %205, %v47
    %v207 = vpop.permute.xlu0 %206
    %209 = vset.pattern.permute.xlu0 1
    %210 = vperm.xlu0 %209, %v48
    %v211 = vpop.permute.xlu0 %210
    %v213 = vlaneseq
    %v214 = vshrl.u32 %v213, 7
    %v215 = vsub.s32 0, %v214
    %v216 = vrot.slane %v32, %v215
    %v217 = vmul.f32 %v151, %v216
    %v218 = vmul.f32 %v155, %v216
    %v219 = vmul.f32 %v159, %v216
    %v220 = vmul.f32 %v163, %v216
    %v221 = vmul.f32 %v167, %v216
    %v222 = vmul.f32 %v171, %v216
    %v223 = vmul.f32 %v175, %v216
    %v224 = vmul.f32 %v179, %v216
    %v225 = vmul.f32 %v183, %v216
    %v226 = vmul.f32 %v187, %v216
    %v227 = vmul.f32 %v191, %v216
    %v228 = vmul.f32 %v195, %v216
    %v229 = vmul.f32 %v199, %v216
    %v230 = vmul.f32 %v203, %v216
    %v231 = vmul.f32 %v207, %v216
    %v232 = vmul.f32 %v211, %v216
    %v233 = vadd.f32 %v133, %v217
    %v234 = vadd.f32 %v134, %v218
    %v235 = vadd.f32 %v135, %v219
    %v236 = vadd.f32 %v136, %v220
    %v237 = vadd.f32 %v137, %v221
    %v238 = vadd.f32 %v138, %v222
    %v239 = vadd.f32 %v139, %v223
    %v240 = vadd.f32 %v140, %v224
    %v241 = vadd.f32 %v141, %v225
    %v242 = vadd.f32 %v142, %v226
    %v243 = vadd.f32 %v143, %v227
    %v244 = vadd.f32 %v144, %v228
    %v245 = vadd.f32 %v145, %v229
    %v246 = vadd.f32 %v146, %v230
    %v247 = vadd.f32 %v147, %v231
    %v248 = vadd.f32 %v148, %v232
    %v249 = vld [vmem:[%s3] sm:$0xff]
    %v250 = vld [vmem:[%s3 + $0x8] sm:$0xff]
    %v251 = vld [vmem:[%s3 + $0x10] sm:$0xff]
    %v252 = vld [vmem:[%s3 + $0x18] sm:$0xff]
    %v253 = vld [vmem:[%s3 + $0x20] sm:$0xff]
    %v254 = vld [vmem:[%s3 + $0x28] sm:$0xff]
    %v255 = vld [vmem:[%s3 + $0x30] sm:$0xff]
    %v256 = vld [vmem:[%s3 + $0x38] sm:$0xff]
    %v257 = vld [vmem:[%s3 + $0x40] sm:$0xff]
    %v258 = vld [vmem:[%s3 + $0x48] sm:$0xff]
    %v259 = vld [vmem:[%s3 + $0x50] sm:$0xff]
    %v260 = vld [vmem:[%s3 + $0x58] sm:$0xff]
    %v261 = vld [vmem:[%s3 + $0x60] sm:$0xff]
    %v262 = vld [vmem:[%s3 + $0x68] sm:$0xff]
    %v263 = vld [vmem:[%s3 + $0x70] sm:$0xff]
    %v264 = vld [vmem:[%s3 + $0x78] sm:$0xff]
    %266 = vset.pattern.permute.xlu0 0
    %267 = vperm.xlu0 %266, %v249
    %v268 = vpop.permute.xlu0 %267
    %271 = vset.pattern.permute.xlu0 0
    %272 = vperm.xlu0 %271, %v250
    %v273 = vpop.permute.xlu0 %272
    %276 = vset.pattern.permute.xlu0 0
    %277 = vperm.xlu0 %276, %v251
    %v278 = vpop.permute.xlu0 %277
    %281 = vset.pattern.permute.xlu0 0
    %282 = vperm.xlu0 %281, %v252
    %v283 = vpop.permute.xlu0 %282
    %286 = vset.pattern.permute.xlu0 0
    %287 = vperm.xlu0 %286, %v253
    %v288 = vpop.permute.xlu0 %287
    %291 = vset.pattern.permute.xlu0 0
    %292 = vperm.xlu0 %291, %v254
    %v293 = vpop.permute.xlu0 %292
    %296 = vset.pattern.permute.xlu0 0
    %297 = vperm.xlu0 %296, %v255
    %v298 = vpop.permute.xlu0 %297
    %301 = vset.pattern.permute.xlu0 0
    %302 = vperm.xlu0 %301, %v256
    %v303 = vpop.permute.xlu0 %302
    %306 = vset.pattern.permute.xlu0 0
    %307 = vperm.xlu0 %306, %v257
    %v308 = vpop.permute.xlu0 %307
    %311 = vset.pattern.permute.xlu0 0
    %312 = vperm.xlu0 %311, %v258
    %v313 = vpop.permute.xlu0 %312
    %316 = vset.pattern.permute.xlu0 0
    %317 = vperm.xlu0 %316, %v259
    %v318 = vpop.permute.xlu0 %317
    %321 = vset.pattern.permute.xlu0 0
    %322 = vperm.xlu0 %321, %v260
    %v323 = vpop.permute.xlu0 %322
    %326 = vset.pattern.permute.xlu0 0
    %327 = vperm.xlu0 %326, %v261
    %v328 = vpop.permute.xlu0 %327
    %331 = vset.pattern.permute.xlu0 0
    %332 = vperm.xlu0 %331, %v262
    %v333 = vpop.permute.xlu0 %332
    %336 = vset.pattern.permute.xlu0 0
    %337 = vperm.xlu0 %336, %v263
    %v338 = vpop.permute.xlu0 %337
    %341 = vset.pattern.permute.xlu0 0
    %342 = vperm.xlu0 %341, %v264
    %v343 = vpop.permute.xlu0 %342
    %v345 = vadd.f32 %v233, %v268
    %v346 = vadd.f32 %v234, %v273
    %v347 = vadd.f32 %v235, %v278
    %v348 = vadd.f32 %v236, %v283
    %v349 = vadd.f32 %v237, %v288
    %v350 = vadd.f32 %v238, %v293
    %v351 = vadd.f32 %v239, %v298
    %v352 = vadd.f32 %v240, %v303
    %v353 = vadd.f32 %v241, %v308
    %v354 = vadd.f32 %v242, %v313
    %v355 = vadd.f32 %v243, %v318
    %v356 = vadd.f32 %v244, %v323
    %v357 = vadd.f32 %v245, %v328
    %v358 = vadd.f32 %v246, %v333
    %v359 = vadd.f32 %v247, %v338
    %v360 = vadd.f32 %v248, %v343
    %v361 = vmax.f32 %v345, 0.0
    %v362 = vmax.f32 %v346, 0.0
    %v363 = vmax.f32 %v347, 0.0
    %v364 = vmax.f32 %v348, 0.0
    %v365 = vmax.f32 %v349, 0.0
    %v366 = vmax.f32 %v350, 0.0
    %v367 = vmax.f32 %v351, 0.0
    %v368 = vmax.f32 %v352, 0.0
    %v369 = vmax.f32 %v353, 0.0
    %v370 = vmax.f32 %v354, 0.0
    %v371 = vmax.f32 %v355, 0.0
    %v372 = vmax.f32 %v356, 0.0
    %v373 = vmax.f32 %v357, 0.0
    %v374 = vmax.f32 %v358, 0.0
    %v375 = vmax.f32 %v359, 0.0
    %v376 = vmax.f32 %v360, 0.0
    %v377 = vld [vmem:[%s4] sm:$0xf]
    %v378 = vld [vmem:[%s4 + $0x4] sm:$0xf]
    %v379 = vld [vmem:[%s4 + $0x8] sm:$0xf]
    %v380 = vld [vmem:[%s4 + $0xc] sm:$0xf]
    %v381 = vld [vmem:[%s4 + $0x10] sm:$0xf]
    %v382 = vld [vmem:[%s4 + $0x14] sm:$0xf]
    %v383 = vld [vmem:[%s4 + $0x18] sm:$0xf]
    %v384 = vld [vmem:[%s4 + $0x1c] sm:$0xf]
    %v385 = vld [vmem:[%s4 + $0x20] sm:$0xf]
    %v386 = vld [vmem:[%s4 + $0x24] sm:$0xf]
    %v387 = vld [vmem:[%s4 + $0x28] sm:$0xf]
    %v388 = vld [vmem:[%s4 + $0x2c] sm:$0xf]
    %v389 = vld [vmem:[%s4 + $0x30] sm:$0xf]
    %v390 = vld [vmem:[%s4 + $0x34] sm:$0xf]
    %v391 = vld [vmem:[%s4 + $0x38] sm:$0xf]
    %v392 = vld [vmem:[%s4 + $0x3c] sm:$0xf]
    %v393 = vpack.c.bf16 %v362, %v361
    %v394 = vpack.c.bf16 %v364, %v363
    %v395 = vpack.c.bf16 %v366, %v365
    %v396 = vpack.c.bf16 %v368, %v367
    %v397 = vpack.c.bf16 %v370, %v369
    %v398 = vpack.c.bf16 %v372, %v371
    %v399 = vpack.c.bf16 %v374, %v373
    %v400 = vpack.c.bf16 %v376, %v375
    %v401 = vld [vmem:[%s5] sm:$0xff]
    %v402 = vld [vmem:[%s5 + $0x8] sm:$0xff]
    %v403 = vld [vmem:[%s5 + $0x10] sm:$0xff]
    %v404 = vld [vmem:[%s5 + $0x18] sm:$0xff]
    %v405 = vld [vmem:[%s5 + $0x20] sm:$0xff]
    %v406 = vld [vmem:[%s5 + $0x28] sm:$0xff]
    %v407 = vld [vmem:[%s5 + $0x30] sm:$0xff]
    %v408 = vld [vmem:[%s5 + $0x38] sm:$0xff]
    %v409 = vld [vmem:[%s5 + $0x40] sm:$0xff]
    %v410 = vld [vmem:[%s5 + $0x48] sm:$0xff]
    %v411 = vld [vmem:[%s5 + $0x50] sm:$0xff]
    %v412 = vld [vmem:[%s5 + $0x58] sm:$0xff]
    %v413 = vld [vmem:[%s5 + $0x60] sm:$0xff]
    %v414 = vld [vmem:[%s5 + $0x68] sm:$0xff]
    %v415 = vld [vmem:[%s5 + $0x70] sm:$0xff]
    %v416 = vld [vmem:[%s5 + $0x78] sm:$0xff]
    %418 = vset.pattern.permute.xlu0 0
    %419 = vperm.xlu0 %418, %v401
    %v420 = vpop.permute.xlu0 %419
    %423 = vset.pattern.permute.xlu0 0
    %424 = vperm.xlu0 %423, %v402
    %v425 = vpop.permute.xlu0 %424
    %428 = vset.pattern.permute.xlu0 0
    %429 = vperm.xlu0 %428, %v403
    %v430 = vpop.permute.xlu0 %429
    %433 = vset.pattern.permute.xlu0 0
    %434 = vperm.xlu0 %433, %v404
    %v435 = vpop.permute.xlu0 %434
    %438 = vset.pattern.permute.xlu0 0
    %439 = vperm.xlu0 %438, %v405
    %v440 = vpop.permute.xlu0 %439
    %443 = vset.pattern.permute.xlu0 0
    %444 = vperm.xlu0 %443, %v406
    %v445 = vpop.permute.xlu0 %444
    %448 = vset.pattern.permute.xlu0 0
    %449 = vperm.xlu0 %448, %v407
    %v450 = vpop.permute.xlu0 %449
    %453 = vset.pattern.permute.xlu0 0
    %454 = vperm.xlu0 %453, %v408
    %v455 = vpop.permute.xlu0 %454
    %458 = vset.pattern.permute.xlu0 0
    %459 = vperm.xlu0 %458, %v409
    %v460 = vpop.permute.xlu0 %459
    %463 = vset.pattern.permute.xlu0 0
    %464 = vperm.xlu0 %463, %v410
    %v465 = vpop.permute.xlu0 %464
    %468 = vset.pattern.permute.xlu0 0
    %469 = vperm.xlu0 %468, %v411
    %v470 = vpop.permute.xlu0 %469
    %473 = vset.pattern.permute.xlu0 0
    %474 = vperm.xlu0 %473, %v412
    %v475 = vpop.permute.xlu0 %474
    %478 = vset.pattern.permute.xlu0 0
    %479 = vperm.xlu0 %478, %v413
    %v480 = vpop.permute.xlu0 %479
    %483 = vset.pattern.permute.xlu0 0
    %484 = vperm.xlu0 %483, %v414
    %v485 = vpop.permute.xlu0 %484
    %488 = vset.pattern.permute.xlu0 0
    %489 = vperm.xlu0 %488, %v415
    %v490 = vpop.permute.xlu0 %489
    %493 = vset.pattern.permute.xlu0 0
    %494 = vperm.xlu0 %493, %v416
    %v495 = vpop.permute.xlu0 %494
    %v513 = vunpack.c.l.b16 %v377
    %v514 = vunpack.c.l.b16 %v378
    %v515 = vunpack.c.l.b16 %v379
    %v516 = vunpack.c.l.b16 %v380
    %v517 = vunpack.c.l.b16 %v381
    %v518 = vunpack.c.l.b16 %v382
    %v519 = vunpack.c.l.b16 %v383
    %v520 = vunpack.c.l.b16 %v384
    %v521 = vunpack.c.l.b16 %v385
    %v522 = vunpack.c.l.b16 %v386
    %v523 = vunpack.c.l.b16 %v387
    %v524 = vunpack.c.l.b16 %v388
    %v525 = vunpack.c.l.b16 %v389
    %v526 = vunpack.c.l.b16 %v390
    %v527 = vunpack.c.l.b16 %v391
    %v528 = vunpack.c.l.b16 %v392
    %v529 = vpack.c.b16 %v514, %v513
    %v530 = vpack.c.b16 %v516, %v515
    %v531 = vpack.c.b16 %v518, %v517
    %v532 = vpack.c.b16 %v520, %v519
    %v533 = vpack.c.b16 %v522, %v521
    %v534 = vpack.c.b16 %v524, %v523
    %v535 = vpack.c.b16 %v526, %v525
    %v536 = vpack.c.b16 %v528, %v527
    %545 = vmatprep.subr.bf16.mxu0 0
    %546 = vmatpush1.bf16.msra.mxu0 %v393
    %547 = vmatprep.subr.bf16.mxu0 0
    %548 = vmatpush1.bf16.msra.mxu0 %v394
    %549 = vmatprep.subr.bf16.mxu0 0
    %550 = vmatpush1.bf16.msra.mxu0 %v395
    %551 = vmatprep.subr.bf16.mxu0 0
    %552 = vmatpush1.bf16.msra.mxu0 %v396
    %553 = vmatprep.subr.bf16.mxu0 0
    %554 = vmatpush1.bf16.msra.mxu0 %v397
    %555 = vmatprep.subr.bf16.mxu0 0
    %556 = vmatpush1.bf16.msra.mxu0 %v398
    %557 = vmatprep.subr.bf16.mxu0 0
    %558 = vmatpush1.bf16.msra.mxu0 %v399
    %559 = vmatprep.subr.bf16.mxu0 0
    %560 = vmatpush1.bf16.msra.mxu0 %v400
    %561 = vmatprep.subr.bf16.mxu0 0
    %562 = vmatpush1.bf16.msra.mxu0 0
    %563 = vmatprep.subr.bf16.mxu0 0
    %564 = vmatpush1.bf16.msra.mxu0 0
    %565 = vmatprep.subr.bf16.mxu0 0
    %566 = vmatpush1.bf16.msra.mxu0 0
    %567 = vmatprep.subr.bf16.mxu0 0
    %568 = vmatpush1.bf16.msra.mxu0 0
    %569 = vmatprep.subr.bf16.mxu0 0
    %570 = vmatpush1.bf16.msra.mxu0 0
    %571 = vmatprep.subr.bf16.mxu0 0
    %572 = vmatpush1.bf16.msra.mxu0 0
    %573 = vmatprep.subr.bf16.mxu0 0
    %574 = vmatpush1.bf16.msra.mxu0 0
    %575 = vmatprep.subr.bf16.mxu0 0
    %576 = vmatpush1.bf16.msra.mxu0 0
    %577 = vmatprep.mubr.bf16.mxu0 0
    %578 = vmatmul.mubr.bf16.gmra.mrb[0].mxu0 %v529
    %v579 = vpop.f32.mrb[0].mxu0
    %v580 = vadd.f32 %v420, %v579
    %v581 = vpop.f32.mrb[0].mxu0
    %v582 = vpop.f32.mrb[0].mxu0
    %v583 = vadd.f32 %v425, %v582
    %v584 = vpop.f32.mrb[0].mxu0
    %585 = vmatprep.mubr.bf16.mxu0 0
    %586 = vmatmul.mubr.bf16.gmra.mrb[0].mxu0 %v530
    %v587 = vpop.f32.mrb[0].mxu0
    %v588 = vadd.f32 %v430, %v587
    %v589 = vpop.f32.mrb[0].mxu0
    %v590 = vpop.f32.mrb[0].mxu0
    %v591 = vadd.f32 %v435, %v590
    %v592 = vpop.f32.mrb[0].mxu0
    %593 = vmatprep.mubr.bf16.mxu0 0
    %594 = vmatmul.mubr.bf16.gmra.mrb[0].mxu0 %v531
    %v595 = vpop.f32.mrb[0].mxu0
    %v596 = vadd.f32 %v440, %v595
    %v597 = vpop.f32.mrb[0].mxu0
    %v598 = vpop.f32.mrb[0].mxu0
    %v599 = vadd.f32 %v445, %v598
    %v600 = vpop.f32.mrb[0].mxu0
    %601 = vmatprep.mubr.bf16.mxu0 0
    %602 = vmatmul.mubr.bf16.gmra.mrb[0].mxu0 %v532
    %v603 = vpop.f32.mrb[0].mxu0
    %v604 = vadd.f32 %v450, %v603
    %v605 = vpop.f32.mrb[0].mxu0
    %v606 = vpop.f32.mrb[0].mxu0
    %v607 = vadd.f32 %v455, %v606
    %v608 = vpop.f32.mrb[0].mxu0
    %609 = vmatprep.mubr.bf16.mxu0 0
    %610 = vmatmul.mubr.bf16.gmra.mrb[0].mxu0 %v533
    %v611 = vpop.f32.mrb[0].mxu0
    %v612 = vadd.f32 %v460, %v611
    %v613 = vpop.f32.mrb[0].mxu0
    %v614 = vpop.f32.mrb[0].mxu0
    %v615 = vadd.f32 %v465, %v614
    %v616 = vpop.f32.mrb[0].mxu0
    %617 = vmatprep.mubr.bf16.mxu0 0
    %618 = vmatmul.mubr.bf16.gmra.mrb[0].mxu0 %v534
    %v619 = vpop.f32.mrb[0].mxu0
    %v620 = vadd.f32 %v470, %v619
    %v621 = vpop.f32.mrb[0].mxu0
    %v622 = vpop.f32.mrb[0].mxu0
    %v623 = vadd.f32 %v475, %v622
    %v624 = vpop.f32.mrb[0].mxu0
    %625 = vmatprep.mubr.bf16.mxu0 0
    %626 = vmatmul.mubr.bf16.gmra.mrb[0].mxu0 %v535
    %v627 = vpop.f32.mrb[0].mxu0
    %v628 = vadd.f32 %v480, %v627
    %v629 = vpop.f32.mrb[0].mxu0
    %v630 = vpop.f32.mrb[0].mxu0
    %v631 = vadd.f32 %v485, %v630
    %v632 = vpop.f32.mrb[0].mxu0
    %633 = vmatprep.mubr.bf16.mxu0 0
    %634 = vmatmul.mubr.bf16.gmra.mrb[0].mxu0 %v536
    %v635 = vpop.f32.mrb[0].mxu0
    %v636 = vadd.f32 %v490, %v635
    %v637 = vpop.f32.mrb[0].mxu0
    %v638 = vpop.f32.mrb[0].mxu0
    %v639 = vadd.f32 %v495, %v638
    %v640 = vpop.f32.mrb[0].mxu0
    %641 = vdwg.mxu0
    %v642 = vmax.f32 %v580, 0.0
    %v643 = vmax.f32 %v583, 0.0
    %v644 = vmax.f32 %v588, 0.0
    %v645 = vmax.f32 %v591, 0.0
    %v646 = vmax.f32 %v596, 0.0
    %v647 = vmax.f32 %v599, 0.0
    %v648 = vmax.f32 %v604, 0.0
    %v649 = vmax.f32 %v607, 0.0
    %v650 = vmax.f32 %v612, 0.0
    %v651 = vmax.f32 %v615, 0.0
    %v652 = vmax.f32 %v620, 0.0
    %v653 = vmax.f32 %v623, 0.0
    %v654 = vmax.f32 %v628, 0.0
    %v655 = vmax.f32 %v631, 0.0
    %v656 = vmax.f32 %v636, 0.0
    %v657 = vmax.f32 %v639, 0.0
    %v658 = vld [vmem:[%s6] sm:$0xf]
    %v659 = vpack.c.bf16 %v643, %v642
    %v660 = vpack.c.bf16 %v645, %v644
    %v661 = vpack.c.bf16 %v647, %v646
    %v662 = vpack.c.bf16 %v649, %v648
    %v663 = vpack.c.bf16 %v651, %v650
    %v664 = vpack.c.bf16 %v653, %v652
    %v665 = vpack.c.bf16 %v655, %v654
    %v666 = vpack.c.bf16 %v657, %v656
    %v667 = vld [vmem:[%s7] sm:$0xff]
    %669 = vset.pattern.permute.xlu0 0
    %670 = vperm.xlu0 %669, %v667
    %v671 = vpop.permute.xlu0 %670
    %673 = vmatprep.subr.bf16.mxu0 0
    %674 = vmatpush1.bf16.msra.mxu0 %v659
    %675 = vmatprep.subr.bf16.mxu0 0
    %676 = vmatpush1.bf16.msra.mxu0 %v660
    %677 = vmatprep.subr.bf16.mxu0 0
    %678 = vmatpush1.bf16.msra.mxu0 %v661
    %679 = vmatprep.subr.bf16.mxu0 0
    %680 = vmatpush1.bf16.msra.mxu0 %v662
    %681 = vmatprep.subr.bf16.mxu0 0
    %682 = vmatpush1.bf16.msra.mxu0 %v663
    %683 = vmatprep.subr.bf16.mxu0 0
    %684 = vmatpush1.bf16.msra.mxu0 %v664
    %685 = vmatprep.subr.bf16.mxu0 0
    %686 = vmatpush1.bf16.msra.mxu0 %v665
    %687 = vmatprep.subr.bf16.mxu0 0
    %688 = vmatpush1.bf16.msra.mxu0 %v666
    %689 = vmatprep.subr.bf16.mxu0 0
    %690 = vmatpush1.bf16.msra.mxu0 0
    %691 = vmatprep.subr.bf16.mxu0 0
    %692 = vmatpush1.bf16.msra.mxu0 0
    %693 = vmatprep.subr.bf16.mxu0 0
    %694 = vmatpush1.bf16.msra.mxu0 0
    %695 = vmatprep.subr.bf16.mxu0 0
    %696 = vmatpush1.bf16.msra.mxu0 0
    %697 = vmatprep.subr.bf16.mxu0 0
    %698 = vmatpush1.bf16.msra.mxu0 0
    %699 = vmatprep.subr.bf16.mxu0 0
    %700 = vmatpush1.bf16.msra.mxu0 0
    %701 = vmatprep.subr.bf16.mxu0 0
    %702 = vmatpush1.bf16.msra.mxu0 0
    %703 = vmatprep.subr.bf16.mxu0 0
    %704 = vmatpush1.bf16.msra.mxu0 0
    %705 = vmatprep.mubr.bf16.mxu0 0
    %706 = vmatmul.mubr.bf16.gmra.mrb[0].mxu0 %v658
    %v707 = vpop.f32.mrb[0].mxu0
    %v708 = vadd.f32 %v671, %v707
    %v709 = vpop.f32.mrb[0].mxu0
    %v710 = vpop.f32.mrb[0].mxu0
    %v711 = vpop.f32.mrb[0].mxu0
    %712 = vdwg.mxu0
    %v713 = vtanh.pop %v708
    %v714 = vmul.f32 %v713, 2.0
    %v715 = vmax.f32 %v708, 0.0
    %v716 = vand.u32 2147483647, %v708
    %v717 = vsub.f32 0.0, %v716
    %v718 = vmul.f32 %v717, 1.442695
    %v719 = vpow.pop %v718
    %v720 = vadd.f32 %v719, 1.0
    %v721 = vlog2.pop %v720
    %v722 = vmul.f32 %v721, 0.6931472
    %v723 = vmul.f32 -0.5, %v719
    %v724 = vadd.f32 %v723, 1.0
    %v725 = vmul.f32 %v724, %v719
    %v726 = vand.u32 2147483647, %v719
    %vm727 = vcmp.lt.f32.partialorder %v726, 0.0004427343
    %v728 = vsel %vm727, %v725, %v722
    %v729 = vadd.f32 %v715, %v728
    %v730 = vadd.f32 %v729, 1e-06
    %v731 = vld [vmem:[%s1] sm:$0x1]
    %v733 = vlaneseq
    %v734 = vshrl.u32 %v733, 7
    %v735 = vsub.s32 0, %v734
    %v736 = vrot.slane %v731, %v735
    %v738 = vmul.f32 %v730, %v736
    %v740 = vrot.slane %v738, 1
    %v742 = vadd.f32 %v714, %v740
    %v743 = vmax.f32 %v742, -2.0
    %v744 = vmin.f32 %v743, 2.0
    %v745 = vrcp.pop %v730
    %v746 = vsub.f32 %v744, %v714
    %v748 = vrot.slane %v745, 1
    %v750 = vmul.f32 %v746, %v748
    %v751 = vlog2.pop %v730
    %v752 = vmul.f32 %v751, 0.6931472
    %v753 = vmul.f32 %v750, -0.5
    %v754 = vmul.f32 %v753, %v750
    %v756 = vrot.slane %v752, 1
    %v758 = vsub.f32 %v754, %v756
    %v759 = vsub.f32 %v758, 0.9189385
    %v760 = vadd.f32 %v752, 1.4189385
    %v762 = vrot.slane %v744, 7
    %v765 = vrot.slane %v760, 7
    %v768 = vrot.slane %v708, 7
    %vm770 = vcmask 1040384
    %v771 = vsel %vm770, %v759, %v762
    %vm772 = vcmask 1041408
    %v773 = vsel %vm772, %v771, %v765
    %vm774 = vcmask 1042432
    %v775 = vsel %vm774, %v773, %v768
    %776 = vst [vmem:[#allocation2] sm:$0xf] %v775
    // Predicated region
    $region34: #{tpu_custom_call.1} parent=1 // pred_check
      _
    $region35: #{tpu_custom_call.1} parent=1 // pred_check_branch
      %778 = sbr.rel (0) target = $region37
    $region36: #{tpu_custom_call.1} parent=1 // pred_region
      %s780 = ssub.s32 64, 64
      %781 = vsyncadd [#allocation3], %s780
      %s783 = sshll.u32 [#allocation2], 4
      %s784 = int_to_ptr.vmem [resolvable:$true] %s783
      %786 = dma.vmem_to_hbm [thread:$0]  %s784, 64, %s8, [#allocation3]
    $region37: #{tpu_custom_call.1} parent=1 // pred_fallthru
      _
    // Predicated region
    $region38: #{tpu_custom_call.1} parent=1 // pred_check
      _
    $region39: #{tpu_custom_call.1} parent=1 // pred_check_branch
      %788 = sbr.rel (0) target = $region41
    $region40: #{tpu_custom_call.1} parent=1 // pred_region
      %789 = dma.done [#allocation3], 64
    $region41: #{tpu_custom_call.1} parent=1 // pred_fallthru
      _
    %790 = vsyncpa [#allocation3], 1

</llo_original>
